<compile_context>
chip_gen: v6e
topology: v6e:2x2x1
jax: 0.10.0
libtpu: 0.0.40
codegen_flags: <defaults>
</compile_context>

<pallas_src>
import jax
import jax.numpy as jnp
from jax.experimental import pallas as pl
from jax.experimental.pallas import tpu as pltpu


def _proj_head_kernel(x_ref, w1_ref, b1_ref, w2_ref, b2_ref, o_ref):
    # x_ref: (Cin, TP) pixel-column tile; weights/biases are full small blocks.
    x = x_ref[...].astype(jnp.float32)

    # 1x1 conv #1 with BN + bias pre-folded into (w1, b1).
    h = jnp.dot(w1_ref[...], x, preferred_element_type=jnp.float32) + b1_ref[...]
    h = jnp.maximum(h, 0.0)                                    # ReLU

    # 1x1 conv #2
    y = jnp.dot(w2_ref[...], h, preferred_element_type=jnp.float32) + b2_ref[...]

    # L2 normalize over channels (sublane axis).  F.normalize eps = 1e-12 on the
    # norm  =>  floor the squared sum at 1e-24 and use rsqrt-multiply (EUP).
    ss = jnp.sum(y * y, axis=0, keepdims=True)                 # (1, TP)
    y = y * jax.lax.rsqrt(jnp.maximum(ss, 1e-24))

    o_ref[...] = y.astype(o_ref.dtype)


def _round_up(x, m):
    return (x + m - 1) // m * m


def projection_head(x_nchw, params, *, max_tile_p=2048, vmem_budget_bytes=24 << 20):
    """ProjectionHead forward (convmlp, eval-mode BN).

    x_nchw: (N, Cin, H, W) -> (N, Cp, H, W), L2-normalized over the channel dim.
    params = (w1, b1, gamma, beta, run_mean, run_var, w2, b2) with conv weights
    in PyTorch orientation after squeezing the 1x1 taps:
        w1: (Cin, Cin) == Conv2d(dim_in, dim_in, 1).weight[:, :, 0, 0]
        w2: (Cp,  Cin) == Conv2d(dim_in, proj_dim, 1).weight[:, :, 0, 0]
    """
    w1, b1, gamma, beta, run_mean, run_var, w2, b2 = params
    eps = 1e-5
    cin = w1.shape[1]
    cp = w2.shape[0]
    n, c, h, w = x_nchw.shape
    assert c == cin and w1.shape == (cin, cin) and w2.shape == (cp, cin)

    # Fold eval-mode BN and the conv1 bias into the first matmul (free at trace time).
    bn_scale = gamma / jnp.sqrt(run_var + eps)                           # (cin,)
    bn_shift = beta - run_mean * bn_scale                                # (cin,)
    w1_eff = (w1 * bn_scale[:, None]).astype(jnp.float32)                # per-out-channel row scale
    b1_eff = (b1 * bn_scale + bn_shift).astype(jnp.float32).reshape(cin, 1)
    w2_f = w2.astype(jnp.float32)
    b2_col = b2.astype(jnp.float32).reshape(cp, 1)

    # Channels-first: only cheap reshapes, spatial on the lane axis.
    hw = h * w
    x3d = x_nchw.reshape(n, cin, hw)

    # Largest lane-dense pixel tile that keeps double-buffered activation tiles
    # inside the VMEM budget (conservative enough for v7x's 64 MiB VMEM).
    bytes_per_col = 2 * (cin + cp) * 4                 # double-buffered f32 in+out columns
    tile_p = max(128, min(max_tile_p, (vmem_budget_bytes // bytes_per_col) // 128 * 128))
    tile_p = min(tile_p, _round_up(hw, 128))

    hw_pad = _round_up(hw, tile_p)
    if hw_pad != hw:
        # Padded pixel columns are independent (per-pixel math) and sliced off below.
        x3d = jnp.pad(x3d, ((0, 0), (0, 0), (0, hw_pad - hw)))

    grid = (n, hw_pad // tile_p)

    const = lambda shape: pl.BlockSpec(shape, lambda ni, pi: (0, 0))

    # VMEM accounting: double-buffered activation tiles + (double-buffered) weights.
    act_bytes = 2 * 4 * tile_p * (cin + cp)
    weight_bytes = 2 * 4 * (cin * cin + cin + cp * cin + cp)
    vmem_limit = int(min(max(2 * (act_bytes + weight_bytes), 32 << 20), 64 << 20))

    out3d = pl.pallas_call(
        _proj_head_kernel,
        out_shape=jax.ShapeDtypeStruct((n, cp, hw_pad), x_nchw.dtype),
        grid_spec=pltpu.PrefetchScalarGridSpec(
            num_scalar_prefetch=0,
            grid=grid,
            in_specs=[
                pl.BlockSpec((None, cin, tile_p), lambda ni, pi: (ni, 0, pi)),  # x tile
                const((cin, cin)),   # w1 (BN folded)
                const((cin, 1)),     # b1 (BN folded)
                const((cp, cin)),    # w2
                const((cp, 1)),      # b2
            ],
            out_specs=pl.BlockSpec((None, cp, tile_p), lambda ni, pi: (ni, 0, pi)),
        ),
        compiler_params=pltpu.CompilerParams(
            dimension_semantics=("parallel", "parallel"),
            vmem_limit_bytes=vmem_limit),
    )(x3d, w1_eff, b1_eff, w2_f, b2_col)

    out3d = out3d[:, :, :hw]
    return out3d.reshape(n, cp, h, w)


def _reference(x_nchw, params):
    """Pure-JAX reference mirroring the PyTorch forward (eval-mode BN)."""
    w1, b1, gamma, beta, run_mean, run_var, w2, b2 = params
    eps = 1e-5
    x = jnp.transpose(x_nchw, (0, 2, 3, 1)).astype(jnp.float32)   # NHWC
    y = x @ w1.T + b1
    y = (y - run_mean) / jnp.sqrt(run_var + eps) * gamma + beta
    y = jnp.maximum(y, 0.0)
    y = y @ w2.T + b2
    norm = jnp.maximum(jnp.sqrt(jnp.sum(y * y, axis=-1, keepdims=True)), 1e-12)
    y = y / norm
    return jnp.transpose(y, (0, 3, 1, 2)).astype(x_nchw.dtype)


if __name__ == "__main__":
    key = jax.random.PRNGKey(0)
    N, Cin, H, W = 2, 4, 16, 16
    Cp = 32  # proj_dim (small for the example)

    k = jax.random.split(key, 8)
    x = jax.random.normal(k[0], (N, Cin, H, W), jnp.float32)

    # Synthetic parameters in PyTorch orientation (Conv2d weight (C_out, C_in, 1, 1) squeezed).
    w1 = jax.random.normal(k[1], (Cin, Cin), jnp.float32) * 0.2
    b1 = jax.random.normal(k[2], (Cin,), jnp.float32) * 0.1
    gamma = 1.0 + 0.1 * jax.random.normal(k[3], (Cin,), jnp.float32)
    beta = 0.1 * jax.random.normal(k[4], (Cin,), jnp.float32)
    run_mean = 0.05 * jax.random.normal(k[5], (Cin,), jnp.float32)
    run_var = jnp.abs(1.0 + 0.1 * jax.random.normal(k[6], (Cin,), jnp.float32))
    w2 = jax.random.normal(k[7], (Cp, Cin), jnp.float32) * 0.2
    b2 = jnp.linspace(-0.1, 0.1, Cp, dtype=jnp.float32)

    params = (w1, b1, gamma, beta, run_mean, run_var, w2, b2)

    out = jax.block_until_ready(projection_head(x, params))
    ref = _reference(x, params)

    assert out.shape == (N, Cp, H, W)
    assert jnp.allclose(out, ref, atol=2e-5, rtol=2e-5), "mismatch vs reference"

    print("KERNEL_OK")
</pallas_src>

<mosaic_0001>
module attributes {stable_mosaic.version = 11 : i64} {
  func.func @_proj_head_kernel(%arg0: i32, %arg1: i32, %arg2: memref<1x4x256xf32, #tpu.memory_space<vmem>>, %arg3: memref<4x4xf32, #tpu.memory_space<vmem>>, %arg4: memref<4x1xf32, #tpu.memory_space<vmem>>, %arg5: memref<32x4xf32, #tpu.memory_space<vmem>>, %arg6: memref<32x1xf32, #tpu.memory_space<vmem>>, %arg7: memref<1x32x256xf32, #tpu.memory_space<vmem>>) attributes {dimension_semantics = [#tpu.dimension_semantics<parallel>, #tpu.dimension_semantics<parallel>], iteration_bounds = array<i64: 2, 1>, scalar_prefetch = 0 : i64, scratch_operands = 0 : i64, tpu.core_type = #tpu.core_type<tc>, window_params = [{transform_indices = @transform_0, window_bounds = array<i64: 1, 4, 256>}, {pipeline_mode = #tpu.pipeline_mode<synchronous>, transform_indices = @transform_1, window_bounds = array<i64: 4, 4>}, {pipeline_mode = #tpu.pipeline_mode<synchronous>, transform_indices = @transform_2, window_bounds = array<i64: 4, 1>}, {pipeline_mode = #tpu.pipeline_mode<synchronous>, transform_indices = @transform_3, window_bounds = array<i64: 32, 4>}, {pipeline_mode = #tpu.pipeline_mode<synchronous>, transform_indices = @transform_4, window_bounds = array<i64: 32, 1>}, {transform_indices = @transform_5, window_bounds = array<i64: 1, 32, 256>}]} {
    %c0 = arith.constant 0 : index
    %c0_0 = arith.constant 0 : index
    %c0_1 = arith.constant 0 : index
    %0 = vector.load %arg2[%c0, %c0_0, %c0_1] : memref<1x4x256xf32, #tpu.memory_space<vmem>>, vector<1x4x256xf32>
    %1 = vector.shape_cast %0 : vector<1x4x256xf32> to vector<4x256xf32>
    %c0_2 = arith.constant 0 : index
    %c0_3 = arith.constant 0 : index
    %2 = vector.load %arg3[%c0_2, %c0_3] : memref<4x4xf32, #tpu.memory_space<vmem>>, vector<4x4xf32>
    %cst = arith.constant dense<0.000000e+00> : vector<4x256xf32>
    %3 = tpu.matmul %2, %1, %cst {dimension_numbers = #tpu.dot_dimension_numbers<[1], [0], [0], [1], [0, 0, 1, 1], [], []>} : vector<4x4xf32>, vector<4x256xf32>, vector<4x256xf32> -> vector<4x256xf32>
    %c0_4 = arith.constant 0 : index
    %c0_5 = arith.constant 0 : index
    %4 = vector.load %arg4[%c0_4, %c0_5] : memref<4x1xf32, #tpu.memory_space<vmem>>, vector<4x1xf32>
    %5 = vector.broadcast %4 : vector<4x1xf32> to vector<4x256xf32>
    %6 = arith.addf %3, %5 : vector<4x256xf32>
    %cst_6 = arith.constant 0.000000e+00 : f32
    %7 = vector.broadcast %cst_6 : f32 to vector<4x256xf32>
    %8 = arith.maximumf %6, %7 : vector<4x256xf32>
    %c0_7 = arith.constant 0 : index
    %c0_8 = arith.constant 0 : index
    %9 = vector.load %arg5[%c0_7, %c0_8] : memref<32x4xf32, #tpu.memory_space<vmem>>, vector<32x4xf32>
    %cst_9 = arith.constant dense<0.000000e+00> : vector<32x256xf32>
    %10 = tpu.matmul %9, %8, %cst_9 {dimension_numbers = #tpu.dot_dimension_numbers<[1], [0], [0], [1], [0, 0, 1, 1], [], []>} : vector<32x4xf32>, vector<4x256xf32>, vector<32x256xf32> -> vector<32x256xf32>
    %c0_10 = arith.constant 0 : index
    %c0_11 = arith.constant 0 : index
    %11 = vector.load %arg6[%c0_10, %c0_11] : memref<32x1xf32, #tpu.memory_space<vmem>>, vector<32x1xf32>
    %12 = vector.broadcast %11 : vector<32x1xf32> to vector<32x256xf32>
    %13 = arith.addf %10, %12 : vector<32x256xf32>
    %14 = arith.mulf %13, %13 : vector<32x256xf32>
    %cst_12 = arith.constant dense<0.000000e+00> : vector<256xf32>
    %15 = vector.multi_reduction <add>, %14, %cst_12 [0] : vector<32x256xf32> to vector<256xf32>
    %16 = vector.shape_cast %15 : vector<256xf32> to vector<1x256xf32>
    %cst_13 = arith.constant 1.000000e-24 : f32
    %17 = vector.broadcast %cst_13 : f32 to vector<1x256xf32>
    %18 = arith.maximumf %16, %17 : vector<1x256xf32>
    %19 = math.rsqrt %18 : vector<1x256xf32>
    %20 = vector.broadcast %19 : vector<1x256xf32> to vector<32x256xf32>
    %21 = arith.mulf %13, %20 : vector<32x256xf32>
    %c0_14 = arith.constant 0 : index
    %c0_15 = arith.constant 0 : index
    %c0_16 = arith.constant 0 : index
    %22 = vector.load %arg7[%c0_14, %c0_15, %c0_16] : memref<1x32x256xf32, #tpu.memory_space<vmem>>, vector<1x32x256xf32>
    %23 = vector.shape_cast %22 : vector<1x32x256xf32> to vector<32x256xf32>
    %24 = vector.shape_cast %21 : vector<32x256xf32> to vector<1x32x256xf32>
    tpu.vector_store %arg7[%c0_14, %c0_15, %c0_16], %24 {strides = array<i32>} : memref<1x32x256xf32, #tpu.memory_space<vmem>>, vector<1x32x256xf32>,
    return
  }
  func.func @transform_0(%arg0: i32, %arg1: i32) -> (i32, i32, i32) {
    %c0_i32 = arith.constant 0 : i32
    %c0_i32_0 = arith.constant 0 : i32
    return %arg0, %c0_i32, %arg1 : i32, i32, i32
  }
  func.func @transform_1(%arg0: i32, %arg1: i32) -> (i32, i32) {
    %c0_i32 = arith.constant 0 : i32
    %c0_i32_0 = arith.constant 0 : i32
    %c0_i32_1 = arith.constant 0 : i32
    return %c0_i32, %c0_i32_0 : i32, i32
  }
  func.func @transform_2(%arg0: i32, %arg1: i32) -> (i32, i32) {
    %c0_i32 = arith.constant 0 : i32
    %c0_i32_0 = arith.constant 0 : i32
    %c0_i32_1 = arith.constant 0 : i32
    return %c0_i32, %c0_i32_0 : i32, i32
  }
  func.func @transform_3(%arg0: i32, %arg1: i32) -> (i32, i32) {
    %c0_i32 = arith.constant 0 : i32
    %c0_i32_0 = arith.constant 0 : i32
    %c0_i32_1 = arith.constant 0 : i32
    return %c0_i32, %c0_i32_0 : i32, i32
  }
  func.func @transform_4(%arg0: i32, %arg1: i32) -> (i32, i32) {
    %c0_i32 = arith.constant 0 : i32
    %c0_i32_0 = arith.constant 0 : i32
    %c0_i32_1 = arith.constant 0 : i32
    return %c0_i32, %c0_i32_0 : i32, i32
  }
  func.func @transform_5(%arg0: i32, %arg1: i32) -> (i32, i32, i32) {
    %c0_i32 = arith.constant 0 : i32
    %c0_i32_0 = arith.constant 0 : i32
    return %arg0, %c0_i32, %arg1 : i32, i32, i32
  }
}

</mosaic_0001>

<llo_original>
// kernel: tpu_custom_call.1
$region0: #{tpu_custom_call.1}
  #allocation0 [shape = 'u32[]', space=smem, size = 0x4, offset = 0x4, fixed_abs, tag = 'smem constant byte address 0x4 - core index']
  #allocation1 [shape = 'u32[144,128]{1,0:T(1,128)}', space=vmem, size = 0x12000, scoped, tag = 'internal scratch']
  %s0 = inlined_call_operand.vmem [shape: f32[2,4,256], index: 0, kind: input, shape index: {}]
  %s1 = inlined_call_operand.vmem [shape: f32[4,4], index: 1, kind: input, shape index: {}]
  %s2 = inlined_call_operand.vmem [shape: f32[4,1], index: 2, kind: input, shape index: {}]
  %s3 = inlined_call_operand.vmem [shape: f32[32,4], index: 3, kind: input, shape index: {}]
  %s4 = inlined_call_operand.vmem [shape: f32[32,1], index: 4, kind: input, shape index: {}]
  %s5 = inlined_call_operand.hbm [shape: f32[2,32,256], index: 5, kind: output, shape index: {}]
  %s6 = sld [smem:[#allocation0]]
  $region53: #{tpu_custom_call.1} parent=0
    _
  %s8 = ssub.s32 1, %s6
  %s9 = scalar_select 0, %s8, %s6
  $region1: #{tpu_custom_call.1} parent=0
    #allocation2 [shape = 'u8[65536]{0}', space=vmem, size = 0x10000, scoped, tag = 'output window, operand 0']
    #allocation3 [shape = 's32[2]{0}', space=sflag, size = 0x8, scoped, tag = 'scoped memory for tpu_custom_call.1']
    %10 = vsyncpa [#allocation3], 0
    %s11 = scalar_lea.sflag [#allocation3], 1
    %12 = vsyncpa %s11, 0
    loop: start=0, step=1, limit=4
    $region2: #{tpu_custom_call.1} parent=1 // loop_pre_header
      _
    $region3: #{tpu_custom_call.1} parent=1 // loop_header
      %s14 = sphi 0, %s18
      %p15 = scmp.ge.s32.totalorder %s14, 4
      %s21 = sphi 0, %s33
      %s22 = sphi 0, %s29
      %s23 = sphi 0, %s21
      %s24 = sphi 0, %s22
      %s25 = sphi 0, %s23
      %s26 = sphi 0, %s24
      %s38 = sphi 0, %s40
      %s41 = sphi 0, %s38
      %s42 = sphi 0, %s41
      %s58 = sphi 0, %s42
      %s62 = sphi 0, %s62
      %s64 = sphi 0, %s62
      %s65 = sphi 0, %s64
      %s79 = sphi 0, %s65
      %s83 = sphi 0, %s83
      %s85 = sphi 0, %s83
      %s86 = sphi 0, %s85
      %s100 = sphi 0, %s86
      %s104 = sphi 0, %s104
      %s106 = sphi 0, %s104
      %s107 = sphi 0, %s106
      %s121 = sphi 0, %s107
      %s125 = sphi 0, %s125
      %s127 = sphi 0, %s125
      %s128 = sphi 0, %s127
      %s142 = sphi 0, %s128
      %s150 = sphi 0, %s152
      %s153 = sphi 0, %s150
      %s154 = sphi 0, %s153
      %s170 = sphi 0, %s154
    $region4: #{tpu_custom_call.1} parent=1 // loop_header_branch
      %17 = sbr.rel (%p15) target = $region8
    $region5: #{tpu_custom_call.1} parent=1 // loop_body
      %s19 = ssub.s32 %s14, 1
      %s20 = ssub.s32 %s14, 2
      %s27 = sadd.s32 1, %s22
      %p28 = scmp.ge.s32.totalorder %s27, 1
      %s29 = scalar_select %p28, 0, %s27
      %s30 = sadd.s32 1, %s21
      %s31 = scalar_select %p28, %s30, %s21
      %p32 = scmp.ge.s32.totalorder %s31, 2
      %s33 = scalar_select %p32, 0, %s31
      %s34 = ssub.s32 %s21, %s33
      %s35 = ssub.s32 %s22, %s29
      %s36 = sor.u32 %s34, %s35
      %p37 = scmp.eq.s32.totalorder %s36, 0
      %s39 = sadd.s32 %s38, 1
      %s40 = scalar_select %p37, %s38, %s39
      %p43 = pneg %p37
      %p44 = scmp.eq.s32.totalorder %s14, 1
      %p45 = por %p43, %p44
      %p46 = scmp.ne.s32.totalorder %s38, %s41
      %p47 = scmp.eq.s32.totalorder %s14, 0
      %p48 = por %p46, %p47
      %p49 = scmp.ne.s32.totalorder %s38, %s41
      %p50 = scmp.eq.s32.totalorder %s19, 1
      %p51 = por %p49, %p50
      %p52 = scmp.ne.s32.totalorder %s41, %s42
      %p53 = scmp.eq.s32.totalorder %s19, 0
      %p54 = por %p52, %p53
      %p55 = scmp.ne.s32.totalorder %s41, %s42
      %p56 = scmp.eq.s32.totalorder %s20, 1
      %p57 = por %p55, %p56
      %p59 = scmp.ne.s32.totalorder %s42, %s58
      %p60 = scmp.eq.s32.totalorder %s20, 0
      %p61 = por %p59, %p60
      %s63 = sadd.s32 %s62, 1
      %p66 = scmp.eq.s32.totalorder %s14, 1
      %p67 = scmp.ne.s32.totalorder %s62, %s64
      %p68 = scmp.eq.s32.totalorder %s14, 0
      %p69 = por %p67, %p68
      %p70 = scmp.ne.s32.totalorder %s62, %s64
      %p71 = scmp.eq.s32.totalorder %s19, 1
      %p72 = por %p70, %p71
      %p73 = scmp.ne.s32.totalorder %s64, %s65
      %p74 = scmp.eq.s32.totalorder %s19, 0
      %p75 = por %p73, %p74
      %p76 = scmp.ne.s32.totalorder %s64, %s65
      %p77 = scmp.eq.s32.totalorder %s20, 1
      %p78 = por %p76, %p77
      %p80 = scmp.ne.s32.totalorder %s65, %s79
      %p81 = scmp.eq.s32.totalorder %s20, 0
      %p82 = por %p80, %p81
      %s84 = sadd.s32 %s83, 1
      %p87 = scmp.eq.s32.totalorder %s14, 1
      %p88 = scmp.ne.s32.totalorder %s83, %s85
      %p89 = scmp.eq.s32.totalorder %s14, 0
      %p90 = por %p88, %p89
      %p91 = scmp.ne.s32.totalorder %s83, %s85
      %p92 = scmp.eq.s32.totalorder %s19, 1
      %p93 = por %p91, %p92
      %p94 = scmp.ne.s32.totalorder %s85, %s86
      %p95 = scmp.eq.s32.totalorder %s19, 0
      %p96 = por %p94, %p95
      %p97 = scmp.ne.s32.totalorder %s85, %s86
      %p98 = scmp.eq.s32.totalorder %s20, 1
      %p99 = por %p97, %p98
      %p101 = scmp.ne.s32.totalorder %s86, %s100
      %p102 = scmp.eq.s32.totalorder %s20, 0
      %p103 = por %p101, %p102
      %s105 = sadd.s32 %s104, 1
      %p108 = scmp.eq.s32.totalorder %s14, 1
      %p109 = scmp.ne.s32.totalorder %s104, %s106
      %p110 = scmp.eq.s32.totalorder %s14, 0
      %p111 = por %p109, %p110
      %p112 = scmp.ne.s32.totalorder %s104, %s106
      %p113 = scmp.eq.s32.totalorder %s19, 1
      %p114 = por %p112, %p113
      %p115 = scmp.ne.s32.totalorder %s106, %s107
      %p116 = scmp.eq.s32.totalorder %s19, 0
      %p117 = por %p115, %p116
      %p118 = scmp.ne.s32.totalorder %s106, %s107
      %p119 = scmp.eq.s32.totalorder %s20, 1
      %p120 = por %p118, %p119
      %p122 = scmp.ne.s32.totalorder %s107, %s121
      %p123 = scmp.eq.s32.totalorder %s20, 0
      %p124 = por %p122, %p123
      %s126 = sadd.s32 %s125, 1
      %p129 = scmp.eq.s32.totalorder %s14, 1
      %p130 = scmp.ne.s32.totalorder %s125, %s127
      %p131 = scmp.eq.s32.totalorder %s14, 0
      %p132 = por %p130, %p131
      %p133 = scmp.ne.s32.totalorder %s125, %s127
      %p134 = scmp.eq.s32.totalorder %s19, 1
      %p135 = por %p133, %p134
      %p136 = scmp.ne.s32.totalorder %s127, %s128
      %p137 = scmp.eq.s32.totalorder %s19, 0
      %p138 = por %p136, %p137
      %p139 = scmp.ne.s32.totalorder %s127, %s128
      %p140 = scmp.eq.s32.totalorder %s20, 1
      %p141 = por %p139, %p140
      %p143 = scmp.ne.s32.totalorder %s128, %s142
      %p144 = scmp.eq.s32.totalorder %s20, 0
      %p145 = por %p143, %p144
      %s146 = ssub.s32 %s21, %s33
      %s147 = ssub.s32 %s22, %s29
      %s148 = sor.u32 %s146, %s147
      %p149 = scmp.eq.s32.totalorder %s148, 0
      %s151 = sadd.s32 %s150, 1
      %s152 = scalar_select %p149, %s150, %s151
      %p155 = pneg %p149
      %p156 = scmp.eq.s32.totalorder %s14, 1
      %p157 = por %p155, %p156
      %p158 = scmp.ne.s32.totalorder %s150, %s153
      %p159 = scmp.eq.s32.totalorder %s14, 0
      %p160 = por %p158, %p159
      %p161 = scmp.ne.s32.totalorder %s150, %s153
      %p162 = scmp.eq.s32.totalorder %s19, 1
      %p163 = por %p161, %p162
      %p164 = scmp.ne.s32.totalorder %s153, %s154
      %p165 = scmp.eq.s32.totalorder %s19, 0
      %p166 = por %p164, %p165
      %p167 = scmp.ne.s32.totalorder %s153, %s154
      %p168 = scmp.eq.s32.totalorder %s20, 1
      %p169 = por %p167, %p168
      %p171 = scmp.ne.s32.totalorder %s154, %s170
      %p172 = scmp.eq.s32.totalorder %s20, 0
      %p173 = por %p171, %p172
      %p174 = scmp.le.s32.totalorder 1, %s14
      %p175 = scmp.lt.s32.totalorder %s14, 3
      %p176 = pnand %p174, %p175
      %p177 = pneg %p176
      // Predicated region
      $region9: #{tpu_custom_call.1} parent=5 // pred_check
        _
      $region10: #{tpu_custom_call.1} parent=5 // pred_check_branch
        %179 = sbr.rel (%p176) target = $region12
      $region11: #{tpu_custom_call.1} parent=5 // pred_region
        %s180 = ssub.s32 %s14, 1
        // Predicated region
        $region13: #{tpu_custom_call.1} parent=11 // pred_check
          %p181 = pneg %p75
        $region14: #{tpu_custom_call.1} parent=11 // pred_check_branch
          %183 = sbr.rel (%p181) target = $region16
        $region15: #{tpu_custom_call.1} parent=11 // pred_region
          _
        $region16: #{tpu_custom_call.1} parent=11 // pred_fallthru
          _
        // Predicated region
        $region17: #{tpu_custom_call.1} parent=11 // pred_check
          %p184 = pneg %p96
        $region18: #{tpu_custom_call.1} parent=11 // pred_check_branch
          %186 = sbr.rel (%p184) target = $region20
        $region19: #{tpu_custom_call.1} parent=11 // pred_region
          _
        $region20: #{tpu_custom_call.1} parent=11 // pred_fallthru
          _
        // Predicated region
        $region21: #{tpu_custom_call.1} parent=11 // pred_check
          %p187 = pneg %p117
        $region22: #{tpu_custom_call.1} parent=11 // pred_check_branch
          %189 = sbr.rel (%p187) target = $region24
        $region23: #{tpu_custom_call.1} parent=11 // pred_region
          _
        $region24: #{tpu_custom_call.1} parent=11 // pred_fallthru
          _
        // Predicated region
        $region25: #{tpu_custom_call.1} parent=11 // pred_check
          %p190 = pneg %p138
        $region26: #{tpu_custom_call.1} parent=11 // pred_check_branch
          %192 = sbr.rel (%p190) target = $region28
        $region27: #{tpu_custom_call.1} parent=11 // pred_region
          _
        $region28: #{tpu_custom_call.1} parent=11 // pred_fallthru
          _
      $region12: #{tpu_custom_call.1} parent=5 // pred_fallthru
        _
      %p193 = scmp.lt.s32.totalorder %s14, 2
      // Predicated region
      $region29: #{tpu_custom_call.1} parent=5 // pred_check
        %p194 = pneg %p193
      $region30: #{tpu_custom_call.1} parent=5 // pred_check_branch
        %196 = sbr.rel (%p194) target = $region32
      $region31: #{tpu_custom_call.1} parent=5 // pred_region
        // Predicated region
        $region33: #{tpu_custom_call.1} parent=31 // pred_check
          %p197 = pneg %p48
        $region34: #{tpu_custom_call.1} parent=31 // pred_check_branch
          %199 = sbr.rel (%p197) target = $region36
        $region35: #{tpu_custom_call.1} parent=31 // pred_region
          %s200 = smul.u32 2, %s22
          %p201 = scmp.lt.s32.totalorder %s21, 1
          %s202 = scalar_select %p201, %s21, 1
          %p203 = scmp.lt.s32.totalorder %s200, 1
          %s204 = scalar_select %p203, %s200, 1
          %s205 = smul.addr %s202, 2
          %s206 = sadd.s32 %s204, %s205
          %s207 = smul.addr %s206, 4
          %s208 = scalar_lea.vmem %s0, %s207
          %s209 = smul.u32 2, %s22
        $region36: #{tpu_custom_call.1} parent=31 // pred_fallthru
          _
      $region32: #{tpu_custom_call.1} parent=5 // pred_fallthru
        _
      %p210 = scmp.le.s32.totalorder 1, %s14
      %p211 = scmp.lt.s32.totalorder %s14, 3
      %p212 = pnand %p210, %p211
      %p213 = pneg %p212
      // Predicated region
      $region37: #{tpu_custom_call.1} parent=5 // pred_check
        _
      $region38: #{tpu_custom_call.1} parent=5 // pred_check_branch
        %215 = sbr.rel (%p212) target = $region40
      $region39: #{tpu_custom_call.1} parent=5 // pred_region
        %s216 = ssub.s32 %s14, 1
        %s217 = smul.u32 2, %s24
        %p218 = scmp.lt.s32.totalorder %s23, 1
        %s219 = scalar_select %p218, %s23, 1
        %p220 = scmp.lt.s32.totalorder %s217, 1
        %s221 = scalar_select %p220, %s217, 1
        %s222 = smul.addr %s219, 2
        %s223 = sadd.s32 %s221, %s222
        %s224 = smul.addr %s223, 4
        %s225 = scalar_lea.vmem %s0, %s224
        %p226 = pneg %p54
        %p227 = pneg %p51
        %p228 = pneg %p75
        %p229 = pneg %p72
        %p230 = pneg %p96
        %p231 = pneg %p93
        %p232 = pneg %p117
        %p233 = pneg %p114
        %p234 = pneg %p138
        %p235 = pneg %p135
        %p236 = pneg %p166
        %p237 = pneg %p163
        %s238 = sand.u32 %s153, 1
        %s239 = scalar_lea.sflag [#allocation3], %s238
        %s240 = sand.u32 %s153, 1
        %s241 = smul.addr %s240, 64
        %s242 = scalar_lea.vmem [#allocation2], %s241
        %s243 = smul.u32 2, %s24
        %p244 = scmp.lt.s32.totalorder %s23, 1
        %s245 = scalar_select %p244, %s23, 1
        %p246 = scmp.lt.s32.totalorder %s243, 1
        %s247 = scalar_select %p246, %s243, 1
        %s248 = smul.addr %s245, 2
        %s249 = sadd.s32 %s247, %s248
        %s250 = smul.addr %s249, 4
        %s251 = scalar_lea.vmem %s0, %s250
        %s252 = smul.u32 2, %s24
        %s253 = smul.u32 2, %s24
        %v254 = vld [vmem:[%s251] sm:$0xff]
        %v255 = vld [vmem:[%s1] sm:$0xf]
        %v256 = vld [vmem:[%s2] sm:$0xf]
        %258 = vset.pattern.permute.xlu0 0
        %259 = vperm.xlu0 %258, %v256
        %v260 = vpop.permute.xlu0 %259
        %v263 = vcombine.high %v254, %v254
        %vm264 = vcmask 31744
        %v266 = vsel %vm264, %v255, 0
        %vm268 = vcmask 1043456
        %v269 = vsel %vm268, %v254, 0
        %v271 = vsel %vm268, %v263, 0
        %273 = vmatprep.subr.mxu0 0.0
        %274 = vmatpush1.msra.mxu0 0.0
        %275 = vmatprep.subr.mxu0 0.0
        %276 = vmatpush1.msra.mxu0 0.0
        %277 = vmatprep.subr.mxu0 0.0
        %278 = vmatpush1.msra.mxu0 0.0
        %279 = vmatprep.subr.mxu0 0.0
        %280 = vmatpush1.msra.mxu0 0.0
        %281 = vmatprep.subr.mxu0 0.0
        %282 = vmatpush1.msra.mxu0 0.0
        %283 = vmatprep.subr.mxu0 0.0
        %284 = vmatpush1.msra.mxu0 0.0
        %285 = vmatprep.subr.mxu0 0.0
        %286 = vmatpush1.msra.mxu0 0.0
        %287 = vmatprep.subr.mxu0 0.0
        %288 = vmatpush1.msra.mxu0 0.0
        %289 = vmatprep.subr.mxu0 0.0
        %290 = vmatpush1.msra.mxu0 0.0
        %291 = vmatprep.subr.mxu0 0.0
        %292 = vmatpush1.msra.mxu0 0.0
        %293 = vmatprep.subr.mxu0 0.0
        %294 = vmatpush1.msra.mxu0 0.0
        %295 = vmatprep.subr.mxu0 0.0
        %296 = vmatpush1.msra.mxu0 0.0
        %297 = vmatprep.subr.mxu0 0.0
        %298 = vmatpush1.msra.mxu0 0.0
        %299 = vmatprep.subr.mxu0 0.0
        %300 = vmatpush1.msra.mxu0 0.0
        %301 = vmatprep.subr.mxu0 0.0
        %302 = vmatpush1.msra.mxu0 0.0
        %303 = vmatprep.subr.mxu0 %v271
        %304 = vmatpush1.msra.mxu0 %v269
        %305 = vmatprep.subr.mxu0 0.0
        %306 = vmatpush2.msra.mxu0 0.0
        %307 = vmatprep.subr.mxu0 0.0
        %308 = vmatpush2.msra.mxu0 0.0
        %309 = vmatprep.subr.mxu0 0.0
        %310 = vmatpush2.msra.mxu0 0.0
        %311 = vmatprep.subr.mxu0 0.0
        %312 = vmatpush2.msra.mxu0 0.0
        %313 = vmatprep.subr.mxu0 0.0
        %314 = vmatpush2.msra.mxu0 0.0
        %315 = vmatprep.subr.mxu0 0.0
        %316 = vmatpush2.msra.mxu0 0.0
        %317 = vmatprep.subr.mxu0 0.0
        %318 = vmatpush2.msra.mxu0 0.0
        %319 = vmatprep.subr.mxu0 0.0
        %320 = vmatpush2.msra.mxu0 0.0
        %321 = vmatprep.subr.mxu0 0.0
        %322 = vmatpush2.msra.mxu0 0.0
        %323 = vmatprep.subr.mxu0 0.0
        %324 = vmatpush2.msra.mxu0 0.0
        %325 = vmatprep.subr.mxu0 0.0
        %326 = vmatpush2.msra.mxu0 0.0
        %327 = vmatprep.subr.mxu0 0.0
        %328 = vmatpush2.msra.mxu0 0.0
        %329 = vmatprep.subr.mxu0 0.0
        %330 = vmatpush2.msra.mxu0 0.0
        %331 = vmatprep.subr.mxu0 0.0
        %332 = vmatpush2.msra.mxu0 0.0
        %333 = vmatprep.subr.mxu0 0.0
        %334 = vmatpush2.msra.mxu0 0.0
        %335 = vmatprep.subr.mxu0 0.0
        %336 = vmatpush2.msra.mxu0 0.0
        %337 = vmatprep.mubr.f32.mxu0 0.0
        %338 = vmatmul.mubr.f32.gmra.mxu0 %v266
        %v339 = vpop.f32.mrf.mxu0
        %v340 = vadd.f32 %v260, %v339
        %v341 = vpop.f32.mrf.mxu0
        %v342 = vadd.f32 %v260, %v341
        %343 = vdwg.mxu0
        %v344 = vmax.f32 %v340, 0.0
        %v345 = vmax.f32 %v342, 0.0
        %v346 = vld [vmem:[%s3] sm:$0xff]
        %v347 = vld [vmem:[%s3 + $0x8] sm:$0xff]
        %v348 = vld [vmem:[%s3 + $0x10] sm:$0xff]
        %v349 = vld [vmem:[%s3 + $0x18] sm:$0xff]
        %v350 = vld [vmem:[%s4] sm:$0xff]
        %v351 = vld [vmem:[%s4 + $0x8] sm:$0xff]
        %v352 = vld [vmem:[%s4 + $0x10] sm:$0xff]
        %v353 = vld [vmem:[%s4 + $0x18] sm:$0xff]
        %355 = vset.pattern.permute.xlu0 0
        %356 = vperm.xlu0 %355, %v350
        %v357 = vpop.permute.xlu0 %356
        %360 = vset.pattern.permute.xlu0 0
        %361 = vperm.xlu0 %360, %v351
        %v362 = vpop.permute.xlu0 %361
        %365 = vset.pattern.permute.xlu0 0
        %366 = vperm.xlu0 %365, %v352
        %v367 = vpop.permute.xlu0 %366
        %370 = vset.pattern.permute.xlu0 0
        %371 = vperm.xlu0 %370, %v353
        %v372 = vpop.permute.xlu0 %371
        %v375 = vsel %vm264, %v346, 0
        %v378 = vsel %vm264, %v347, 0
        %v381 = vsel %vm264, %v348, 0
        %v384 = vsel %vm264, %v349, 0
        %v387 = vsel %vm268, %v344, 0
        %v390 = vsel %vm268, %v345, 0
        %392 = vmatprep.subr.mxu0 0.0
        %393 = vmatpush1.msra.mxu0 0.0
        %394 = vmatprep.subr.mxu0 0.0
        %395 = vmatpush1.msra.mxu0 0.0
        %396 = vmatprep.subr.mxu0 0.0
        %397 = vmatpush1.msra.mxu0 0.0
        %398 = vmatprep.subr.mxu0 0.0
        %399 = vmatpush1.msra.mxu0 0.0
        %400 = vmatprep.subr.mxu0 0.0
        %401 = vmatpush1.msra.mxu0 0.0
        %402 = vmatprep.subr.mxu0 0.0
        %403 = vmatpush1.msra.mxu0 0.0
        %404 = vmatprep.subr.mxu0 0.0
        %405 = vmatpush1.msra.mxu0 0.0
        %406 = vmatprep.subr.mxu0 0.0
        %407 = vmatpush1.msra.mxu0 0.0
        %408 = vmatprep.subr.mxu0 0.0
        %409 = vmatpush1.msra.mxu0 0.0
        %410 = vmatprep.subr.mxu0 0.0
        %411 = vmatpush1.msra.mxu0 0.0
        %412 = vmatprep.subr.mxu0 0.0
        %413 = vmatpush1.msra.mxu0 0.0
        %414 = vmatprep.subr.mxu0 0.0
        %415 = vmatpush1.msra.mxu0 0.0
        %416 = vmatprep.subr.mxu0 0.0
        %417 = vmatpush1.msra.mxu0 0.0
        %418 = vmatprep.subr.mxu0 0.0
        %419 = vmatpush1.msra.mxu0 0.0
        %420 = vmatprep.subr.mxu0 0.0
        %421 = vmatpush1.msra.mxu0 0.0
        %422 = vmatprep.subr.mxu0 %v390
        %423 = vmatpush1.msra.mxu0 %v387
        %424 = vmatprep.subr.mxu0 0.0
        %425 = vmatpush2.msra.mxu0 0.0
        %426 = vmatprep.subr.mxu0 0.0
        %427 = vmatpush2.msra.mxu0 0.0
        %428 = vmatprep.subr.mxu0 0.0
        %429 = vmatpush2.msra.mxu0 0.0
        %430 = vmatprep.subr.mxu0 0.0
        %431 = vmatpush2.msra.mxu0 0.0
        %432 = vmatprep.subr.mxu0 0.0
        %433 = vmatpush2.msra.mxu0 0.0
        %434 = vmatprep.subr.mxu0 0.0
        %435 = vmatpush2.msra.mxu0 0.0
        %436 = vmatprep.subr.mxu0 0.0
        %437 = vmatpush2.msra.mxu0 0.0
        %438 = vmatprep.subr.mxu0 0.0
        %439 = vmatpush2.msra.mxu0 0.0
        %440 = vmatprep.subr.mxu0 0.0
        %441 = vmatpush2.msra.mxu0 0.0
        %442 = vmatprep.subr.mxu0 0.0
        %443 = vmatpush2.msra.mxu0 0.0
        %444 = vmatprep.subr.mxu0 0.0
        %445 = vmatpush2.msra.mxu0 0.0
        %446 = vmatprep.subr.mxu0 0.0
        %447 = vmatpush2.msra.mxu0 0.0
        %448 = vmatprep.subr.mxu0 0.0
        %449 = vmatpush2.msra.mxu0 0.0
        %450 = vmatprep.subr.mxu0 0.0
        %451 = vmatpush2.msra.mxu0 0.0
        %452 = vmatprep.subr.mxu0 0.0
        %453 = vmatpush2.msra.mxu0 0.0
        %454 = vmatprep.subr.mxu0 0.0
        %455 = vmatpush2.msra.mxu0 0.0
        %456 = vmatprep.mubr.f32.mxu0 0.0
        %457 = vmatmul.mubr.f32.gmra.mxu0 %v375
        %v458 = vpop.f32.mrf.mxu0
        %v459 = vadd.f32 %v357, %v458
        %v460 = vpop.f32.mrf.mxu0
        %v461 = vadd.f32 %v357, %v460
        %462 = vmatprep.mubr.f32.mxu0 0.0
        %463 = vmatmul.mubr.f32.gmra.mxu0 %v378
        %v464 = vpop.f32.mrf.mxu0
        %v465 = vadd.f32 %v362, %v464
        %v466 = vpop.f32.mrf.mxu0
        %v467 = vadd.f32 %v362, %v466
        %468 = vmatprep.mubr.f32.mxu0 0.0
        %469 = vmatmul.mubr.f32.gmra.mxu0 %v381
        %v470 = vpop.f32.mrf.mxu0
        %v471 = vadd.f32 %v367, %v470
        %v472 = vpop.f32.mrf.mxu0
        %v473 = vadd.f32 %v367, %v472
        %474 = vmatprep.mubr.f32.mxu0 0.0
        %475 = vmatmul.mubr.f32.gmra.mxu0 %v384
        %v476 = vpop.f32.mrf.mxu0
        %v477 = vadd.f32 %v372, %v476
        %v478 = vpop.f32.mrf.mxu0
        %v479 = vadd.f32 %v372, %v478
        %480 = vdwg.mxu0
        %v481 = vmul.f32 %v459, %v459
        %v482 = vmul.f32 %v461, %v461
        %v483 = vmul.f32 %v465, %v465
        %v484 = vmul.f32 %v467, %v467
        %v485 = vmul.f32 %v471, %v471
        %v486 = vmul.f32 %v473, %v473
        %v487 = vmul.f32 %v477, %v477
        %v488 = vmul.f32 %v479, %v479
        %v489 = vadd.f32 %v481, %v483
        %v490 = vadd.f32 %v489, %v485
        %v491 = vadd.f32 %v490, %v487
        %v492 = vrot.slane %v491, 4
        %v493 = vadd.f32 %v491, %v492
        %v494 = vrot.slane %v493, 2
        %v495 = vadd.f32 %v493, %v494
        %v496 = vrot.slane %v495, 1
        %v497 = vadd.f32 %v495, %v496
        %v498 = vadd.f32 %v482, %v484
        %v499 = vadd.f32 %v498, %v486
        %v500 = vadd.f32 %v499, %v488
        %v501 = vrot.slane %v500, 4
        %v502 = vadd.f32 %v500, %v501
        %v503 = vrot.slane %v502, 2
        %v504 = vadd.f32 %v502, %v503
        %v505 = vrot.slane %v504, 1
        %v506 = vadd.f32 %v504, %v505
        %v507 = vmax.f32 %v497, 1e-24
        %v508 = vmax.f32 %v506, 1e-24
        %v509 = vrsqrt.pop %v507
        %v510 = vrsqrt.pop %v508
        %v511 = vmul.f32 %v459, %v509
        %v512 = vmul.f32 %v461, %v510
        %v513 = vmul.f32 %v465, %v509
        %v514 = vmul.f32 %v467, %v510
        %v515 = vmul.f32 %v471, %v509
        %v516 = vmul.f32 %v473, %v510
        %v517 = vmul.f32 %v477, %v509
        %v518 = vmul.f32 %v479, %v510
        %519 = vst [vmem:[%s242] sm:$0xff] %v511
        %520 = vst [vmem:[%s242 + $0x8] sm:$0xff] %v512
        %521 = vst [vmem:[%s242 + $0x10] sm:$0xff] %v513
        %522 = vst [vmem:[%s242 + $0x18] sm:$0xff] %v514
        %523 = vst [vmem:[%s242 + $0x20] sm:$0xff] %v515
        %524 = vst [vmem:[%s242 + $0x28] sm:$0xff] %v516
        %525 = vst [vmem:[%s242 + $0x30] sm:$0xff] %v517
        %526 = vst [vmem:[%s242 + $0x38] sm:$0xff] %v518
        %s527 = sand.u32 %s153, 1
        %s528 = scalar_lea.sflag [#allocation3], %s527
        %s529 = sand.u32 %s153, 1
        %s530 = smul.addr %s529, 64
        %s531 = scalar_lea.vmem [#allocation2], %s530
        // Predicated region
        $region41: #{tpu_custom_call.1} parent=39 // pred_check
          %p532 = pneg %p163
        $region42: #{tpu_custom_call.1} parent=39 // pred_check_branch
          %534 = sbr.rel (%p532) target = $region44
        $region43: #{tpu_custom_call.1} parent=39 // pred_region
          %s535 = smul.u32 2, %s24
          %s537 = ssub.s32 1024, 1024
          %538 = vsyncadd %s528, %s537
          %s539 = smul.addr %s23, 8
          %s540 = sadd.s32 %s535, %s539
          %s541 = smul.addr %s540, 128
          %s542 = scalar_lea.hbm %s5, %s541
          %s543 = sshll.u32 %s531, 4
          %s544 = int_to_ptr.vmem [resolvable:$true] %s543
          %549 = dma.vmem_to_hbm [thread:$0]  %s544, 1024, %s542, %s528, 256, 256, 16
        $region44: #{tpu_custom_call.1} parent=39 // pred_fallthru
          _
      $region40: #{tpu_custom_call.1} parent=5 // pred_fallthru
        _
      %p550 = scmp.le.s32.totalorder 2, %s14
      // Predicated region
      $region45: #{tpu_custom_call.1} parent=5 // pred_check
        %p551 = pneg %p550
      $region46: #{tpu_custom_call.1} parent=5 // pred_check_branch
        %553 = sbr.rel (%p551) target = $region48
      $region47: #{tpu_custom_call.1} parent=5 // pred_region
        %s554 = ssub.s32 %s14, 2
        // Predicated region
        $region49: #{tpu_custom_call.1} parent=47 // pred_check
          %p555 = pneg %p169
        $region50: #{tpu_custom_call.1} parent=47 // pred_check_branch
          %557 = sbr.rel (%p555) target = $region52
        $region51: #{tpu_custom_call.1} parent=47 // pred_region
          %s558 = sand.u32 %s154, 1
          %s559 = scalar_lea.sflag [#allocation3], %s558
          %s560 = sand.u32 %s154, 1
          %s561 = smul.addr %s560, 64
          %s562 = scalar_lea.vmem [#allocation2], %s561
          %563 = dma.done %s559, 1024
        $region52: #{tpu_custom_call.1} parent=47 // pred_fallthru
          _
      $region48: #{tpu_custom_call.1} parent=5 // pred_fallthru
        _
    $region6: #{tpu_custom_call.1} parent=1 // loop_footer
      %s18 = sadd.s32 1, %s14
    $region7: #{tpu_custom_call.1} parent=1 // loop_footer_branch
      %13 = sbr.rel target = $region3
    $region8: #{tpu_custom_call.1} parent=1 // loop_exit
      _
    %564 = vsyncpa [#allocation3], 1
    %s565 = scalar_lea.sflag [#allocation3], 1
    %566 = vsyncpa %s565, 1

</llo_original>
